<compile_context>
chip_gen: v6e
topology: v6e:2x2x1
jax: 0.10.0
libtpu: 0.0.40
codegen_flags: <defaults>
</compile_context>

<pallas_src>
import jax
import jax.numpy as jnp
from jax.experimental import pallas as pl
from jax.experimental.pallas import tpu as pltpu


def _swish(x):
    return x * jax.nn.sigmoid(x)


def _packed_mlp_kernel(x_ref, w1_ref, b1_ref, w2_ref, b2_ref,
                       w3_ref, b3_ref, out_ref):
    # x_ref: (TB, E*S); weights are block-diagonal packed, biases lane-packed.
    # NOTE: for MXU-scale shapes on v6e/v7x, cast x/h to bf16 before the dots
    # (keep f32 accumulation); at the small sizes here it is overhead-bound.
    x = x_ref[...]
    h1 = jnp.dot(x, w1_ref[...], preferred_element_type=jnp.float32) + b1_ref[...]
    h1 = _swish(h1)                                            # (TB, E*H)
    h2 = jnp.dot(h1, w2_ref[...], preferred_element_type=jnp.float32) + b2_ref[...]
    h2 = _swish(h2)                                            # (TB, E*H)
    out = jnp.dot(h2, w3_ref[...], preferred_element_type=jnp.float32) + b3_ref[...]
    out_ref[...] = out.astype(out_ref.dtype)                   # (TB, E)


def _block_diag(w):
    """(E, A, C) -> (E*A, E*C) block-diagonal: member e occupies block (e, e)."""
    E, A, C = w.shape
    eye = jnp.eye(E, dtype=w.dtype)
    return jnp.einsum("eac,ef->eafc", w, eye).reshape(E * A, E * C)


def pack_params(params):
    """One-time wrapper-side packing of ensemble params into lane-packed form."""
    E, S, H = params["w1"].shape
    return {
        "E": E, "S": S, "H": H,
        "w1": _block_diag(params["w1"]),           # (E*S, E*H)
        "b1": params["b1"].reshape(1, E * H),      # (1, E*H)
        "w2": _block_diag(params["w2"]),           # (E*H, E*H)
        "b2": params["b2"].reshape(1, E * H),      # (1, E*H)
        "w3": _block_diag(params["w3"]),           # (E*H, E)  head + segmented sum
        "b3": params["b3"].reshape(1, E),          # (1, E)
    }


def ensemble_reward_forward(state, packed):
    """Pallas forward of EnsembleRewardModel (default, non per-transition path).

    state: (E, B, S) float32
    returns: (E, B, 1) float32   (matches torch .squeeze(dim=1), a no-op for B>1)
    """
    E, B, S = state.shape
    H = packed["H"]
    assert packed["E"] == E and packed["S"] == S

    # Lane-pack the activations: x_packed[b, e*S + s] = state[e, b, s].
    x_packed = jnp.transpose(state, (1, 0, 2)).reshape(B, E * S)

    # Single invocation for small B; tile the batch only when it is large
    # (weights stay resident via constant index_maps; batch axis is "parallel"
    # so v7x can shard tiles across its 2 TensorCores).
    TB = 512 if (B > 512 and B % 512 == 0) else B
    nb = B // TB

    out = pl.pallas_call(
        _packed_mlp_kernel,
        out_shape=jax.ShapeDtypeStruct((B, E), jnp.float32),
        grid=(nb,),
        in_specs=[
            pl.BlockSpec((TB, E * S), lambda i: (i, 0)),      # x (batch-tiled)
            pl.BlockSpec((E * S, E * H), lambda i: (0, 0)),   # W1 block-diag
            pl.BlockSpec((1, E * H), lambda i: (0, 0)),       # b1
            pl.BlockSpec((E * H, E * H), lambda i: (0, 0)),   # W2 block-diag
            pl.BlockSpec((1, E * H), lambda i: (0, 0)),       # b2
            pl.BlockSpec((E * H, E), lambda i: (0, 0)),       # W3 block-diag
            pl.BlockSpec((1, E), lambda i: (0, 0)),           # b3
        ],
        out_specs=pl.BlockSpec((TB, E), lambda i: (i, 0)),
        compiler_params=pltpu.CompilerParams(
            dimension_semantics=("parallel",)),
    )(x_packed, packed["w1"], packed["b1"], packed["w2"], packed["b2"],
      packed["w3"], packed["b3"])

    # (B, E) -> (E, B, 1): layout plumbing in the wrapper, kernel stays lane-dense.
    return jnp.transpose(out)[:, :, None]


def init_params(key, state_size, hidden_size, ensemble_size):
    """Deterministic param init mirroring EnsembleDenseLayer.__init__."""
    def xavier_uniform(k, shape):          # swish layers
        fan_in, fan_out = shape[-2], shape[-1]
        bound = jnp.sqrt(6.0 / (fan_in + fan_out))
        return jax.random.uniform(k, shape, jnp.float32, -bound, bound)

    def xavier_normal(k, shape):           # linear output layer
        fan_in, fan_out = shape[-2], shape[-1]
        std = jnp.sqrt(2.0 / (fan_in + fan_out))
        return std * jax.random.normal(k, shape, jnp.float32)

    k1, k2, k3 = jax.random.split(key, 3)
    E, S, H = ensemble_size, state_size, hidden_size
    return {
        "w1": xavier_uniform(k1, (E, S, H)),
        "b1": jnp.zeros((E, 1, H), jnp.float32),
        "w2": xavier_uniform(k2, (E, H, H)),
        "b2": jnp.zeros((E, 1, H), jnp.float32),
        "w3": xavier_normal(k3, (E, H, 1)),
        "b3": jnp.zeros((E, 1, 1), jnp.float32),
    }


def _reference_forward(state, params):
    h1 = _swish(jnp.einsum("ebs,esh->ebh", state, params["w1"]) + params["b1"])
    h2 = _swish(jnp.einsum("ebh,ehk->ebk", h1, params["w2"]) + params["b2"])
    return jnp.einsum("ebh,eho->ebo", h2, params["w3"]) + params["b3"]


if __name__ == "__main__":
    ensemble_size = 4
    batch = 8
    state_size = 16
    hidden_size = 32

    key = jax.random.PRNGKey(0)
    pk, sk = jax.random.split(key)
    params = init_params(pk, state_size, hidden_size, ensemble_size)
    packed = pack_params(params)          # one-time block-diagonal packing
    state = jax.random.normal(sk, (ensemble_size, batch, state_size), jnp.float32)

    out = ensemble_reward_forward(state, packed)
    jax.block_until_ready(out)

    ref = _reference_forward(state, params)
    assert out.shape == (ensemble_size, batch, 1), out.shape
    assert jnp.allclose(out, ref, atol=1e-4, rtol=1e-4), \
        float(jnp.max(jnp.abs(out - ref)))
    # TODO(synk): reward_ensemble_per_transition_ensemble=True path (python loop
    # over ensemble repeats) not implemented; only the default forward path is.
    print("KERNEL_OK")
</pallas_src>

<mosaic_0001>
module attributes {stable_mosaic.version = 11 : i64} {
  func.func @_packed_mlp_kernel(%arg0: i32, %arg1: memref<8x64xf32, #tpu.memory_space<vmem>>, %arg2: memref<64x128xf32, #tpu.memory_space<vmem>>, %arg3: memref<1x128xf32, #tpu.memory_space<vmem>>, %arg4: memref<128x128xf32, #tpu.memory_space<vmem>>, %arg5: memref<1x128xf32, #tpu.memory_space<vmem>>, %arg6: memref<128x4xf32, #tpu.memory_space<vmem>>, %arg7: memref<1x4xf32, #tpu.memory_space<vmem>>, %arg8: memref<8x4xf32, #tpu.memory_space<vmem>>) attributes {dimension_semantics = [#tpu.dimension_semantics<parallel>], iteration_bounds = array<i64: 1>, scalar_prefetch = 0 : i64, scratch_operands = 0 : i64, tpu.core_type = #tpu.core_type<tc>, window_params = [{transform_indices = @transform_0, window_bounds = array<i64: 8, 64>}, {pipeline_mode = #tpu.pipeline_mode<synchronous>, transform_indices = @transform_1, window_bounds = array<i64: 64, 128>}, {pipeline_mode = #tpu.pipeline_mode<synchronous>, transform_indices = @transform_2, window_bounds = array<i64: 1, 128>}, {pipeline_mode = #tpu.pipeline_mode<synchronous>, transform_indices = @transform_3, window_bounds = array<i64: 128, 128>}, {pipeline_mode = #tpu.pipeline_mode<synchronous>, transform_indices = @transform_4, window_bounds = array<i64: 1, 128>}, {pipeline_mode = #tpu.pipeline_mode<synchronous>, transform_indices = @transform_5, window_bounds = array<i64: 128, 4>}, {pipeline_mode = #tpu.pipeline_mode<synchronous>, transform_indices = @transform_6, window_bounds = array<i64: 1, 4>}, {transform_indices = @transform_7, window_bounds = array<i64: 8, 4>}]} {
    %c0 = arith.constant 0 : index
    %c0_0 = arith.constant 0 : index
    %0 = vector.load %arg1[%c0, %c0_0] : memref<8x64xf32, #tpu.memory_space<vmem>>, vector<8x64xf32>
    %c0_1 = arith.constant 0 : index
    %c0_2 = arith.constant 0 : index
    %1 = vector.load %arg2[%c0_1, %c0_2] : memref<64x128xf32, #tpu.memory_space<vmem>>, vector<64x128xf32>
    %cst = arith.constant dense<0.000000e+00> : vector<8x128xf32>
    %2 = tpu.matmul %0, %1, %cst {dimension_numbers = #tpu.dot_dimension_numbers<[1], [0], [0], [1], [0, 0, 1, 1], [], []>} : vector<8x64xf32>, vector<64x128xf32>, vector<8x128xf32> -> vector<8x128xf32>
    %c0_3 = arith.constant 0 : index
    %c0_4 = arith.constant 0 : index
    %3 = vector.load %arg3[%c0_3, %c0_4] : memref<1x128xf32, #tpu.memory_space<vmem>>, vector<1x128xf32>
    %4 = vector.broadcast %3 : vector<1x128xf32> to vector<8x128xf32>
    %5 = arith.addf %2, %4 : vector<8x128xf32>
    %6 = arith.negf %5 : vector<8x128xf32>
    %7 = math.exp %6 : vector<8x128xf32>
    %cst_5 = arith.constant 1.000000e+00 : f32
    %8 = vector.broadcast %cst_5 : f32 to vector<8x128xf32>
    %9 = arith.addf %8, %7 : vector<8x128xf32>
    %10 = arith.divf %8, %9 : vector<8x128xf32>
    %11 = arith.mulf %5, %10 : vector<8x128xf32>
    %c0_6 = arith.constant 0 : index
    %c0_7 = arith.constant 0 : index
    %12 = vector.load %arg4[%c0_6, %c0_7] : memref<128x128xf32, #tpu.memory_space<vmem>>, vector<128x128xf32>
    %cst_8 = arith.constant dense<0.000000e+00> : vector<8x128xf32>
    %13 = tpu.matmul %11, %12, %cst_8 {dimension_numbers = #tpu.dot_dimension_numbers<[1], [0], [0], [1], [0, 0, 1, 1], [], []>} : vector<8x128xf32>, vector<128x128xf32>, vector<8x128xf32> -> vector<8x128xf32>
    %c0_9 = arith.constant 0 : index
    %c0_10 = arith.constant 0 : index
    %14 = vector.load %arg5[%c0_9, %c0_10] : memref<1x128xf32, #tpu.memory_space<vmem>>, vector<1x128xf32>
    %15 = vector.broadcast %14 : vector<1x128xf32> to vector<8x128xf32>
    %16 = arith.addf %13, %15 : vector<8x128xf32>
    %17 = arith.negf %16 : vector<8x128xf32>
    %18 = math.exp %17 : vector<8x128xf32>
    %cst_11 = arith.constant 1.000000e+00 : f32
    %19 = vector.broadcast %cst_11 : f32 to vector<8x128xf32>
    %20 = arith.addf %19, %18 : vector<8x128xf32>
    %21 = arith.divf %19, %20 : vector<8x128xf32>
    %22 = arith.mulf %16, %21 : vector<8x128xf32>
    %c0_12 = arith.constant 0 : index
    %c0_13 = arith.constant 0 : index
    %23 = vector.load %arg6[%c0_12, %c0_13] : memref<128x4xf32, #tpu.memory_space<vmem>>, vector<128x4xf32>
    %cst_14 = arith.constant dense<0.000000e+00> : vector<8x4xf32>
    %24 = tpu.matmul %22, %23, %cst_14 {dimension_numbers = #tpu.dot_dimension_numbers<[1], [0], [0], [1], [0, 0, 1, 1], [], []>} : vector<8x128xf32>, vector<128x4xf32>, vector<8x4xf32> -> vector<8x4xf32>
    %c0_15 = arith.constant 0 : index
    %c0_16 = arith.constant 0 : index
    %25 = vector.load %arg7[%c0_15, %c0_16] : memref<1x4xf32, #tpu.memory_space<vmem>>, vector<1x4xf32>
    %26 = vector.broadcast %25 : vector<1x4xf32> to vector<8x4xf32>
    %27 = arith.addf %24, %26 : vector<8x4xf32>
    %c0_17 = arith.constant 0 : index
    %c0_18 = arith.constant 0 : index
    %28 = vector.load %arg8[%c0_17, %c0_18] : memref<8x4xf32, #tpu.memory_space<vmem>>, vector<8x4xf32>
    tpu.vector_store %arg8[%c0_17, %c0_18], %27 {strides = array<i32>} : memref<8x4xf32, #tpu.memory_space<vmem>>, vector<8x4xf32>,
    return
  }
  func.func @transform_0(%arg0: i32) -> (i32, i32) {
    %c0_i32 = arith.constant 0 : i32
    %c0_i32_0 = arith.constant 0 : i32
    return %arg0, %c0_i32 : i32, i32
  }
  func.func @transform_1(%arg0: i32) -> (i32, i32) {
    %c0_i32 = arith.constant 0 : i32
    %c0_i32_0 = arith.constant 0 : i32
    %c0_i32_1 = arith.constant 0 : i32
    return %c0_i32, %c0_i32_0 : i32, i32
  }
  func.func @transform_2(%arg0: i32) -> (i32, i32) {
    %c0_i32 = arith.constant 0 : i32
    %c0_i32_0 = arith.constant 0 : i32
    %c0_i32_1 = arith.constant 0 : i32
    return %c0_i32, %c0_i32_0 : i32, i32
  }
  func.func @transform_3(%arg0: i32) -> (i32, i32) {
    %c0_i32 = arith.constant 0 : i32
    %c0_i32_0 = arith.constant 0 : i32
    %c0_i32_1 = arith.constant 0 : i32
    return %c0_i32, %c0_i32_0 : i32, i32
  }
  func.func @transform_4(%arg0: i32) -> (i32, i32) {
    %c0_i32 = arith.constant 0 : i32
    %c0_i32_0 = arith.constant 0 : i32
    %c0_i32_1 = arith.constant 0 : i32
    return %c0_i32, %c0_i32_0 : i32, i32
  }
  func.func @transform_5(%arg0: i32) -> (i32, i32) {
    %c0_i32 = arith.constant 0 : i32
    %c0_i32_0 = arith.constant 0 : i32
    %c0_i32_1 = arith.constant 0 : i32
    return %c0_i32, %c0_i32_0 : i32, i32
  }
  func.func @transform_6(%arg0: i32) -> (i32, i32) {
    %c0_i32 = arith.constant 0 : i32
    %c0_i32_0 = arith.constant 0 : i32
    %c0_i32_1 = arith.constant 0 : i32
    return %c0_i32, %c0_i32_0 : i32, i32
  }
  func.func @transform_7(%arg0: i32) -> (i32, i32) {
    %c0_i32 = arith.constant 0 : i32
    %c0_i32_0 = arith.constant 0 : i32
    return %arg0, %c0_i32 : i32, i32
  }
}

</mosaic_0001>

<llo_original>
// kernel: tpu_custom_call.1
$region0: #{tpu_custom_call.1}
  #allocation0 [shape = 'u32[]', space=smem, size = 0x4, offset = 0x4, fixed_abs, tag = 'smem constant byte address 0x4 - core index']
  #allocation1 [shape = 'u32[144,128]{1,0:T(1,128)}', space=vmem, size = 0x12000, scoped, tag = 'internal scratch']
  %s0 = inlined_call_operand.vmem [shape: f32[8,64], index: 0, kind: input, shape index: {}]
  %s1 = inlined_call_operand.hbm [shape: f32[64,128], index: 1, kind: input, shape index: {}]
  %s2 = inlined_call_operand.vmem [shape: f32[1,128], index: 2, kind: input, shape index: {}]
  %s3 = inlined_call_operand.vmem [shape: f32[128,128], index: 3, kind: input, shape index: {}]
  %s4 = inlined_call_operand.hbm [shape: f32[1,128], index: 4, kind: input, shape index: {}]
  %s5 = inlined_call_operand.vmem [shape: f32[128,4], index: 5, kind: input, shape index: {}]
  %s6 = inlined_call_operand.vmem [shape: f32[1,4], index: 6, kind: input, shape index: {}]
  %s7 = inlined_call_operand.vmem [shape: f32[8,4], index: 7, kind: output, shape index: {}]
  %s8 = sld [smem:[#allocation0]]
  $region46: #{tpu_custom_call.1} parent=0
    _
  %s10 = ssub.s32 1, %s8
  %s11 = scalar_select 0, %s10, %s8
  $region1: #{tpu_custom_call.1} parent=0
    #allocation2 [shape = 'u8[32768]{0}', space=vmem, size = 0x8000, scoped, tag = 'input window, operand 1, single buffered']
    #allocation3 [shape = 's32[1]{0}', space=sflag, size = 0x4, scoped, tag = 'scoped memory for tpu_custom_call.1']
    #allocation4 [shape = 'u8[512]{0}', space=vmem, size = 0x400, scoped, tag = 'input window, operand 4, single buffered']
    #allocation5 [shape = 's32[1]{0}', space=sflag, size = 0x4, scoped, tag = 'scoped memory for tpu_custom_call.1']
    %12 = vsyncpa [#allocation3], 0
    %13 = vsyncpa [#allocation5], 0
    // Predicated region
    $region2: #{tpu_custom_call.1} parent=1 // pred_check
      _
    $region3: #{tpu_custom_call.1} parent=1 // pred_check_branch
      %15 = sbr.rel (0) target = $region5
    $region4: #{tpu_custom_call.1} parent=1 // pred_region
      _
    $region5: #{tpu_custom_call.1} parent=1 // pred_fallthru
      _
    // Predicated region
    $region6: #{tpu_custom_call.1} parent=1 // pred_check
      _
    $region7: #{tpu_custom_call.1} parent=1 // pred_check_branch
      %17 = sbr.rel (0) target = $region9
    $region8: #{tpu_custom_call.1} parent=1 // pred_region
      %s19 = ssub.s32 1024, 1024
      %20 = vsyncadd [#allocation3], %s19
      %s21 = sshll.u32 [#allocation2], 4
      %s22 = int_to_ptr.vmem [resolvable:$true] %s21
      %27 = dma.hbm_to_vmem [thread:$0]  %s1, 1024, %s22, [#allocation3], 128, 128, 8
    $region9: #{tpu_custom_call.1} parent=1 // pred_fallthru
      _
    // Predicated region
    $region10: #{tpu_custom_call.1} parent=1 // pred_check
      _
    $region11: #{tpu_custom_call.1} parent=1 // pred_check_branch
      %29 = sbr.rel (0) target = $region13
    $region12: #{tpu_custom_call.1} parent=1 // pred_region
      _
    $region13: #{tpu_custom_call.1} parent=1 // pred_fallthru
      _
    // Predicated region
    $region14: #{tpu_custom_call.1} parent=1 // pred_check
      _
    $region15: #{tpu_custom_call.1} parent=1 // pred_check_branch
      %31 = sbr.rel (0) target = $region17
    $region16: #{tpu_custom_call.1} parent=1 // pred_region
      _
    $region17: #{tpu_custom_call.1} parent=1 // pred_fallthru
      _
    // Predicated region
    $region18: #{tpu_custom_call.1} parent=1 // pred_check
      _
    $region19: #{tpu_custom_call.1} parent=1 // pred_check_branch
      %33 = sbr.rel (0) target = $region21
    $region20: #{tpu_custom_call.1} parent=1 // pred_region
      %s35 = ssub.s32 16, 16
      %36 = vsyncadd [#allocation5], %s35
      %s38 = sshll.u32 [#allocation4], 4
      %s39 = int_to_ptr.vmem [resolvable:$true] %s38
      %41 = dma.hbm_to_vmem [thread:$0]  %s4, 16, %s39, [#allocation5]
    $region21: #{tpu_custom_call.1} parent=1 // pred_fallthru
      _
    // Predicated region
    $region22: #{tpu_custom_call.1} parent=1 // pred_check
      _
    $region23: #{tpu_custom_call.1} parent=1 // pred_check_branch
      %43 = sbr.rel (0) target = $region25
    $region24: #{tpu_custom_call.1} parent=1 // pred_region
      _
    $region25: #{tpu_custom_call.1} parent=1 // pred_fallthru
      _
    // Predicated region
    $region26: #{tpu_custom_call.1} parent=1 // pred_check
      _
    $region27: #{tpu_custom_call.1} parent=1 // pred_check_branch
      %45 = sbr.rel (0) target = $region29
    $region28: #{tpu_custom_call.1} parent=1 // pred_region
      _
    $region29: #{tpu_custom_call.1} parent=1 // pred_fallthru
      _
    // Predicated region
    $region30: #{tpu_custom_call.1} parent=1 // pred_check
      _
    $region31: #{tpu_custom_call.1} parent=1 // pred_check_branch
      %47 = sbr.rel (0) target = $region33
    $region32: #{tpu_custom_call.1} parent=1 // pred_region
      %48 = dma.done [#allocation3], 1024
    $region33: #{tpu_custom_call.1} parent=1 // pred_fallthru
      _
    // Predicated region
    $region34: #{tpu_custom_call.1} parent=1 // pred_check
      _
    $region35: #{tpu_custom_call.1} parent=1 // pred_check_branch
      %50 = sbr.rel (0) target = $region37
    $region36: #{tpu_custom_call.1} parent=1 // pred_region
      %51 = dma.done [#allocation5], 16
    $region37: #{tpu_custom_call.1} parent=1 // pred_fallthru
      _
    %v52 = vld [vmem:[%s0] sm:$0xff]
    %v53 = vld [vmem:[#allocation2] sm:$0xff]
    %v54 = vld [vmem:[#allocation2 + $0x8] sm:$0xff]
    %v55 = vld [vmem:[#allocation2 + $0x10] sm:$0xff]
    %v56 = vld [vmem:[#allocation2 + $0x18] sm:$0xff]
    %v57 = vld [vmem:[#allocation2 + $0x20] sm:$0xff]
    %v58 = vld [vmem:[#allocation2 + $0x28] sm:$0xff]
    %v59 = vld [vmem:[#allocation2 + $0x30] sm:$0xff]
    %v60 = vld [vmem:[#allocation2 + $0x38] sm:$0xff]
    %v61 = vld [vmem:[%s2] sm:$0x1]
    %v63 = vlaneseq
    %v64 = vshrl.u32 %v63, 7
    %v65 = vsub.s32 0, %v64
    %v66 = vrot.slane %v61, %v65
    %vm68 = vcmask 523264
    %v70 = vsel %vm68, %v52, 0
    %72 = vmatprep.subr.mxu0 0.0
    %73 = vmatpush1.msra.mxu0 0.0
    %74 = vmatprep.subr.mxu0 0.0
    %75 = vmatpush1.msra.mxu0 0.0
    %76 = vmatprep.subr.mxu0 0.0
    %77 = vmatpush1.msra.mxu0 0.0
    %78 = vmatprep.subr.mxu0 0.0
    %79 = vmatpush1.msra.mxu0 0.0
    %80 = vmatprep.subr.mxu0 0.0
    %81 = vmatpush1.msra.mxu0 0.0
    %82 = vmatprep.subr.mxu0 0.0
    %83 = vmatpush1.msra.mxu0 0.0
    %84 = vmatprep.subr.mxu0 0.0
    %85 = vmatpush1.msra.mxu0 0.0
    %86 = vmatprep.subr.mxu0 0.0
    %87 = vmatpush1.msra.mxu0 0.0
    %88 = vmatprep.subr.mxu0 0.0
    %89 = vmatpush1.msra.mxu0 %v60
    %90 = vmatprep.subr.mxu0 0.0
    %91 = vmatpush1.msra.mxu0 %v59
    %92 = vmatprep.subr.mxu0 0.0
    %93 = vmatpush1.msra.mxu0 %v58
    %94 = vmatprep.subr.mxu0 0.0
    %95 = vmatpush1.msra.mxu0 %v57
    %96 = vmatprep.subr.mxu0 0.0
    %97 = vmatpush1.msra.mxu0 %v56
    %98 = vmatprep.subr.mxu0 0.0
    %99 = vmatpush1.msra.mxu0 %v55
    %100 = vmatprep.subr.mxu0 0.0
    %101 = vmatpush1.msra.mxu0 %v54
    %102 = vmatprep.subr.mxu0 0.0
    %103 = vmatpush1.msra.mxu0 %v53
    %104 = vmatprep.subr.mxu0 0.0
    %105 = vmatpush2.msra.mxu0 0.0
    %106 = vmatprep.subr.mxu0 0.0
    %107 = vmatpush2.msra.mxu0 0.0
    %108 = vmatprep.subr.mxu0 0.0
    %109 = vmatpush2.msra.mxu0 0.0
    %110 = vmatprep.subr.mxu0 0.0
    %111 = vmatpush2.msra.mxu0 0.0
    %112 = vmatprep.subr.mxu0 0.0
    %113 = vmatpush2.msra.mxu0 0.0
    %114 = vmatprep.subr.mxu0 0.0
    %115 = vmatpush2.msra.mxu0 0.0
    %116 = vmatprep.subr.mxu0 0.0
    %117 = vmatpush2.msra.mxu0 0.0
    %118 = vmatprep.subr.mxu0 0.0
    %119 = vmatpush2.msra.mxu0 0.0
    %120 = vmatprep.subr.mxu0 0.0
    %121 = vmatpush2.msra.mxu0 0.0
    %122 = vmatprep.subr.mxu0 0.0
    %123 = vmatpush2.msra.mxu0 0.0
    %124 = vmatprep.subr.mxu0 0.0
    %125 = vmatpush2.msra.mxu0 0.0
    %126 = vmatprep.subr.mxu0 0.0
    %127 = vmatpush2.msra.mxu0 0.0
    %128 = vmatprep.subr.mxu0 0.0
    %129 = vmatpush2.msra.mxu0 0.0
    %130 = vmatprep.subr.mxu0 0.0
    %131 = vmatpush2.msra.mxu0 0.0
    %132 = vmatprep.subr.mxu0 0.0
    %133 = vmatpush2.msra.mxu0 0.0
    %134 = vmatprep.subr.mxu0 0.0
    %135 = vmatpush2.msra.mxu0 0.0
    %136 = vmatprep.mubr.f32.mxu0 0.0
    %137 = vmatmul.mubr.f32.gmra.mxu0 %v70
    %v138 = vpop.f32.mrf.mxu0
    %v139 = vadd.f32 %v66, %v138
    %v140 = vpop.f32.mrf.mxu0
    %141 = vdwg.mxu0
    %v142 = vxor.u32 %v139, 2147483648
    %v143 = vmul.f32 %v142, 1.442695
    %v144 = vpow.pop %v143
    %v145 = vadd.f32 %v144, 1.0
    %v146 = vrcp.pop %v145
    %v147 = vmul.f32 1.0, %v146
    %v148 = vmul.f32 %v139, %v147
    %v149 = vld [vmem:[%s3] sm:$0xff]
    %v150 = vld [vmem:[%s3 + $0x8] sm:$0xff]
    %v151 = vld [vmem:[%s3 + $0x10] sm:$0xff]
    %v152 = vld [vmem:[%s3 + $0x18] sm:$0xff]
    %v153 = vld [vmem:[%s3 + $0x20] sm:$0xff]
    %v154 = vld [vmem:[%s3 + $0x28] sm:$0xff]
    %v155 = vld [vmem:[%s3 + $0x30] sm:$0xff]
    %v156 = vld [vmem:[%s3 + $0x38] sm:$0xff]
    %v157 = vld [vmem:[%s3 + $0x40] sm:$0xff]
    %v158 = vld [vmem:[%s3 + $0x48] sm:$0xff]
    %v159 = vld [vmem:[%s3 + $0x50] sm:$0xff]
    %v160 = vld [vmem:[%s3 + $0x58] sm:$0xff]
    %v161 = vld [vmem:[%s3 + $0x60] sm:$0xff]
    %v162 = vld [vmem:[%s3 + $0x68] sm:$0xff]
    %v163 = vld [vmem:[%s3 + $0x70] sm:$0xff]
    %v164 = vld [vmem:[%s3 + $0x78] sm:$0xff]
    %v165 = vld [vmem:[#allocation4] sm:$0x1]
    %v167 = vlaneseq
    %v168 = vshrl.u32 %v167, 7
    %v169 = vsub.s32 0, %v168
    %v170 = vrot.slane %v165, %v169
    %172 = vmatprep.subr.mxu0 0.0
    %173 = vmatpush1.msra.mxu0 %v164
    %174 = vmatprep.subr.mxu0 0.0
    %175 = vmatpush1.msra.mxu0 %v163
    %176 = vmatprep.subr.mxu0 0.0
    %177 = vmatpush1.msra.mxu0 %v162
    %178 = vmatprep.subr.mxu0 0.0
    %179 = vmatpush1.msra.mxu0 %v161
    %180 = vmatprep.subr.mxu0 0.0
    %181 = vmatpush1.msra.mxu0 %v160
    %182 = vmatprep.subr.mxu0 0.0
    %183 = vmatpush1.msra.mxu0 %v159
    %184 = vmatprep.subr.mxu0 0.0
    %185 = vmatpush1.msra.mxu0 %v158
    %186 = vmatprep.subr.mxu0 0.0
    %187 = vmatpush1.msra.mxu0 %v157
    %188 = vmatprep.subr.mxu0 0.0
    %189 = vmatpush1.msra.mxu0 %v156
    %190 = vmatprep.subr.mxu0 0.0
    %191 = vmatpush1.msra.mxu0 %v155
    %192 = vmatprep.subr.mxu0 0.0
    %193 = vmatpush1.msra.mxu0 %v154
    %194 = vmatprep.subr.mxu0 0.0
    %195 = vmatpush1.msra.mxu0 %v153
    %196 = vmatprep.subr.mxu0 0.0
    %197 = vmatpush1.msra.mxu0 %v152
    %198 = vmatprep.subr.mxu0 0.0
    %199 = vmatpush1.msra.mxu0 %v151
    %200 = vmatprep.subr.mxu0 0.0
    %201 = vmatpush1.msra.mxu0 %v150
    %202 = vmatprep.subr.mxu0 0.0
    %203 = vmatpush1.msra.mxu0 %v149
    %204 = vmatprep.subr.mxu0 0.0
    %205 = vmatpush2.msra.mxu0 0.0
    %206 = vmatprep.subr.mxu0 0.0
    %207 = vmatpush2.msra.mxu0 0.0
    %208 = vmatprep.subr.mxu0 0.0
    %209 = vmatpush2.msra.mxu0 0.0
    %210 = vmatprep.subr.mxu0 0.0
    %211 = vmatpush2.msra.mxu0 0.0
    %212 = vmatprep.subr.mxu0 0.0
    %213 = vmatpush2.msra.mxu0 0.0
    %214 = vmatprep.subr.mxu0 0.0
    %215 = vmatpush2.msra.mxu0 0.0
    %216 = vmatprep.subr.mxu0 0.0
    %217 = vmatpush2.msra.mxu0 0.0
    %218 = vmatprep.subr.mxu0 0.0
    %219 = vmatpush2.msra.mxu0 0.0
    %220 = vmatprep.subr.mxu0 0.0
    %221 = vmatpush2.msra.mxu0 0.0
    %222 = vmatprep.subr.mxu0 0.0
    %223 = vmatpush2.msra.mxu0 0.0
    %224 = vmatprep.subr.mxu0 0.0
    %225 = vmatpush2.msra.mxu0 0.0
    %226 = vmatprep.subr.mxu0 0.0
    %227 = vmatpush2.msra.mxu0 0.0
    %228 = vmatprep.subr.mxu0 0.0
    %229 = vmatpush2.msra.mxu0 0.0
    %230 = vmatprep.subr.mxu0 0.0
    %231 = vmatpush2.msra.mxu0 0.0
    %232 = vmatprep.subr.mxu0 0.0
    %233 = vmatpush2.msra.mxu0 0.0
    %234 = vmatprep.subr.mxu0 0.0
    %235 = vmatpush2.msra.mxu0 0.0
    %236 = vmatprep.mubr.f32.mxu0 0.0
    %237 = vmatmul.mubr.f32.gmra.mxu0 %v148
    %v238 = vpop.f32.mrf.mxu0
    %v239 = vadd.f32 %v170, %v238
    %v240 = vpop.f32.mrf.mxu0
    %241 = vdwg.mxu0
    %v242 = vxor.u32 %v239, 2147483648
    %v243 = vmul.f32 %v242, 1.442695
    %v244 = vpow.pop %v243
    %v245 = vadd.f32 %v244, 1.0
    %v246 = vrcp.pop %v245
    %v247 = vmul.f32 1.0, %v246
    %v248 = vmul.f32 %v239, %v247
    %v249 = vld [vmem:[%s5] sm:$0xff]
    %v250 = vld [vmem:[%s5 + $0x8] sm:$0xff]
    %v251 = vld [vmem:[%s5 + $0x10] sm:$0xff]
    %v252 = vld [vmem:[%s5 + $0x18] sm:$0xff]
    %v253 = vld [vmem:[%s5 + $0x20] sm:$0xff]
    %v254 = vld [vmem:[%s5 + $0x28] sm:$0xff]
    %v255 = vld [vmem:[%s5 + $0x30] sm:$0xff]
    %v256 = vld [vmem:[%s5 + $0x38] sm:$0xff]
    %v257 = vld [vmem:[%s5 + $0x40] sm:$0xff]
    %v258 = vld [vmem:[%s5 + $0x48] sm:$0xff]
    %v259 = vld [vmem:[%s5 + $0x50] sm:$0xff]
    %v260 = vld [vmem:[%s5 + $0x58] sm:$0xff]
    %v261 = vld [vmem:[%s5 + $0x60] sm:$0xff]
    %v262 = vld [vmem:[%s5 + $0x68] sm:$0xff]
    %v263 = vld [vmem:[%s5 + $0x70] sm:$0xff]
    %v264 = vld [vmem:[%s5 + $0x78] sm:$0xff]
    %v265 = vld [vmem:[%s6] sm:$0x1]
    %v267 = vlaneseq
    %v268 = vshrl.u32 %v267, 7
    %v269 = vsub.s32 0, %v268
    %v270 = vrot.slane %v265, %v269
    %272 = vmatprep.subr.mxu0 0.0
    %273 = vmatpush1.msra.mxu0 %v264
    %274 = vmatprep.subr.mxu0 0.0
    %275 = vmatpush1.msra.mxu0 %v263
    %276 = vmatprep.subr.mxu0 0.0
    %277 = vmatpush1.msra.mxu0 %v262
    %278 = vmatprep.subr.mxu0 0.0
    %279 = vmatpush1.msra.mxu0 %v261
    %280 = vmatprep.subr.mxu0 0.0
    %281 = vmatpush1.msra.mxu0 %v260
    %282 = vmatprep.subr.mxu0 0.0
    %283 = vmatpush1.msra.mxu0 %v259
    %284 = vmatprep.subr.mxu0 0.0
    %285 = vmatpush1.msra.mxu0 %v258
    %286 = vmatprep.subr.mxu0 0.0
    %287 = vmatpush1.msra.mxu0 %v257
    %288 = vmatprep.subr.mxu0 0.0
    %289 = vmatpush1.msra.mxu0 %v256
    %290 = vmatprep.subr.mxu0 0.0
    %291 = vmatpush1.msra.mxu0 %v255
    %292 = vmatprep.subr.mxu0 0.0
    %293 = vmatpush1.msra.mxu0 %v254
    %294 = vmatprep.subr.mxu0 0.0
    %295 = vmatpush1.msra.mxu0 %v253
    %296 = vmatprep.subr.mxu0 0.0
    %297 = vmatpush1.msra.mxu0 %v252
    %298 = vmatprep.subr.mxu0 0.0
    %299 = vmatpush1.msra.mxu0 %v251
    %300 = vmatprep.subr.mxu0 0.0
    %301 = vmatpush1.msra.mxu0 %v250
    %302 = vmatprep.subr.mxu0 0.0
    %303 = vmatpush1.msra.mxu0 %v249
    %304 = vmatprep.subr.mxu0 0.0
    %305 = vmatpush2.msra.mxu0 0.0
    %306 = vmatprep.subr.mxu0 0.0
    %307 = vmatpush2.msra.mxu0 0.0
    %308 = vmatprep.subr.mxu0 0.0
    %309 = vmatpush2.msra.mxu0 0.0
    %310 = vmatprep.subr.mxu0 0.0
    %311 = vmatpush2.msra.mxu0 0.0
    %312 = vmatprep.subr.mxu0 0.0
    %313 = vmatpush2.msra.mxu0 0.0
    %314 = vmatprep.subr.mxu0 0.0
    %315 = vmatpush2.msra.mxu0 0.0
    %316 = vmatprep.subr.mxu0 0.0
    %317 = vmatpush2.msra.mxu0 0.0
    %318 = vmatprep.subr.mxu0 0.0
    %319 = vmatpush2.msra.mxu0 0.0
    %320 = vmatprep.subr.mxu0 0.0
    %321 = vmatpush2.msra.mxu0 0.0
    %322 = vmatprep.subr.mxu0 0.0
    %323 = vmatpush2.msra.mxu0 0.0
    %324 = vmatprep.subr.mxu0 0.0
    %325 = vmatpush2.msra.mxu0 0.0
    %326 = vmatprep.subr.mxu0 0.0
    %327 = vmatpush2.msra.mxu0 0.0
    %328 = vmatprep.subr.mxu0 0.0
    %329 = vmatpush2.msra.mxu0 0.0
    %330 = vmatprep.subr.mxu0 0.0
    %331 = vmatpush2.msra.mxu0 0.0
    %332 = vmatprep.subr.mxu0 0.0
    %333 = vmatpush2.msra.mxu0 0.0
    %334 = vmatprep.subr.mxu0 0.0
    %335 = vmatpush2.msra.mxu0 0.0
    %336 = vmatprep.mubr.f32.mxu0 0.0
    %337 = vmatmul.mubr.f32.gmra.mxu0 %v248
    %v338 = vpop.f32.mrf.mxu0
    %v339 = vadd.f32 %v270, %v338
    %v340 = vpop.f32.mrf.mxu0
    %341 = vdwg.mxu0
    %vm342 = vcmask 31744
    %343 = vst.msk [vmem:[%s7] sm:$0xff] %vm342, %v339
    // Predicated region
    $region38: #{tpu_custom_call.1} parent=1 // pred_check
      _
    $region39: #{tpu_custom_call.1} parent=1 // pred_check_branch
      %345 = sbr.rel (0) target = $region41
    $region40: #{tpu_custom_call.1} parent=1 // pred_region
      _
    $region41: #{tpu_custom_call.1} parent=1 // pred_fallthru
      _
    // Predicated region
    $region42: #{tpu_custom_call.1} parent=1 // pred_check
      _
    $region43: #{tpu_custom_call.1} parent=1 // pred_check_branch
      %347 = sbr.rel (0) target = $region45
    $region44: #{tpu_custom_call.1} parent=1 // pred_region
      _
    $region45: #{tpu_custom_call.1} parent=1 // pred_fallthru
      _
    %348 = vsyncpa [#allocation3], 1
    %349 = vsyncpa [#allocation5], 1

</llo_original>
